<compile_context>
chip_gen: v7x
topology: tpu7x:2x2x1
jax: 0.10.0
libtpu: 0.0.40
codegen_flags: <defaults>
</compile_context>

<pallas_src>
import functools

import jax
import jax.numpy as jnp
from jax.experimental import pallas as pl
from jax.experimental.pallas import tpu as pltpu

_LANE = 128
_SUBLANE = 8


def _round_up(x, m):
    return ((x + m - 1) // m) * m


def _cdiv(a, b):
    return (a + b - 1) // b


# ---------------------------------------------------------------------------
# Kernel (batch on the lane axis).
# ---------------------------------------------------------------------------
def actor_kernel(
    x_ref,    # (in_dim, TB)  bf16   concat(inputs, preference), transposed
    w1_ref,   # (2H, in_dim)  bf16
    b1_ref,   # (2H, 1)       f32
    w2_ref,   # (H, 2H)       bf16
    b2_ref,   # (H, 1)        f32
    w3_ref,   # (A_sub, H)    bf16   mu head, out dim padded to 8 sublanes
    b3_ref,   # (A_sub, 1)    f32
    mu_ref,   # (A_sub, TB)   f32    output
):
    x = x_ref[...]

    # layer 1: bf16 matmul on the MXU, f32 accumulate + bias + ReLU
    h1 = jnp.dot(w1_ref[...], x, preferred_element_type=jnp.float32) + b1_ref[...]
    h1 = jnp.maximum(h1, 0.0)                                   # (2H, TB) f32

    # layer 2
    h2 = (
        jnp.dot(w2_ref[...], h1.astype(w2_ref.dtype),
                preferred_element_type=jnp.float32)
        + b2_ref[...]
    )
    h2 = jnp.maximum(h2, 0.0)                                   # (H, TB) f32

    # mu head + tanh (padded sublane rows hold zero weights/bias -> tanh(0)=0)
    mu = (
        jnp.dot(w3_ref[...], h2.astype(w3_ref.dtype),
                preferred_element_type=jnp.float32)
        + b3_ref[...]
    )
    mu_ref[...] = jnp.tanh(mu).astype(mu_ref.dtype)             # (A_sub, TB)


# ---------------------------------------------------------------------------
# One-time parameter repacking (hoisted out of the per-call forward).
# ---------------------------------------------------------------------------
def prepare_params(params):
    """Repack PyTorch-layout params (W: (out,in), b: (out,)) for the kernel.

    Weights -> bf16, biases -> f32 column vectors, mu head padded to 8 output
    rows (f32 sublane multiple). Call once; reuse the result every forward.
    """
    w1, b1, w2, b2, w3, b3 = params
    A, H = w3.shape
    A_sub = max(_SUBLANE, _round_up(A, _SUBLANE))

    w3p = jnp.zeros((A_sub, H), w3.dtype).at[:A, :].set(w3)
    b3p = jnp.zeros((A_sub,), b3.dtype).at[:A].set(b3)

    return (
        w1.astype(jnp.bfloat16),
        b1.astype(jnp.float32).reshape(-1, 1),
        w2.astype(jnp.bfloat16),
        b2.astype(jnp.float32).reshape(-1, 1),
        w3p.astype(jnp.bfloat16),
        b3p.astype(jnp.float32).reshape(-1, 1),
    )


def _pick_tile(B, block_batch):
    """Choose (TB, n_steps). TB is a lane-axis tile -> multiple of 128."""
    block_batch = max(_LANE, _round_up(block_batch, _LANE))
    B_ceil = max(_LANE, _round_up(B, _LANE))
    if B_ceil <= 2 * _LANE:
        # Tiny batch: a single grid step (no pipeline prologue/epilogue);
        # megacore sharding would not help in this overhead-dominated regime.
        return B_ceil, 1
    # Otherwise: an even number (>=2) of grid steps so the "parallel" batch
    # axis can split across the two v7x TensorCores; cap each step's tile.
    n_steps = max(2, _cdiv(B_ceil, block_batch))
    if n_steps % 2:
        n_steps += 1
    TB = max(_LANE, _round_up(_cdiv(B_ceil, n_steps), _LANE))
    return TB, n_steps


# ---------------------------------------------------------------------------
# Forward wrapper.
# ---------------------------------------------------------------------------
@functools.partial(jax.jit, static_argnames=("num_actions", "block_batch"))
def actor_forward(inputs, preference, packed_params, *, num_actions,
                  block_batch=2048):
    """inputs: (B, num_inputs) f32, preference: (B, reward_size) f32 -> (B, A)."""
    w1, b1, w2, b2, w3, b3 = packed_params
    B = inputs.shape[0]
    H2, in_dim = w1.shape
    H = w2.shape[0]
    A_sub = w3.shape[0]

    # Concat once, cast to bf16 and put the batch on the lane axis.
    x_t = jnp.concatenate([inputs, preference], axis=1).astype(jnp.bfloat16).T

    TB, n_steps = _pick_tile(B, block_batch)
    B_pad = TB * n_steps
    if B_pad != B:
        x_t = jnp.pad(x_t, ((0, 0), (0, B_pad - B)))

    def resident(shape):
        # Same block every grid step => stays VMEM-resident, no re-DMA.
        return pl.BlockSpec(shape, lambda i: (0, 0))

    mu_padded = pl.pallas_call(
        actor_kernel,
        out_shape=jax.ShapeDtypeStruct((A_sub, B_pad), jnp.float32),
        grid=(n_steps,),
        in_specs=[
            pl.BlockSpec((in_dim, TB), lambda i: (0, i)),   # activations tiled on lanes
            resident((H2, in_dim)),
            resident((H2, 1)),
            resident((H, H2)),
            resident((H, 1)),
            resident((A_sub, H)),
            resident((A_sub, 1)),
        ],
        out_specs=pl.BlockSpec((A_sub, TB), lambda i: (0, i)),
        compiler_params=pltpu.CompilerParams(
            dimension_semantics=("parallel",),      # megacore split on v7x
            vmem_limit_bytes=32 * 1024 * 1024,      # safe on v7x's 64 MiB VMEM
        ),
    )(x_t, w1, b1, w2, b2, w3, b3)

    return mu_padded[:num_actions, :B].T


# ---------------------------------------------------------------------------
# Reference + synthetic init (nn.Linear layout: W (out, in), b (out,)).
# ---------------------------------------------------------------------------
def init_actor_params(key, hidden_size, num_inputs, num_outputs, reward_size):
    """Deterministic synthetic init mirroring Actor.__init__ shapes/dists."""
    ks = jax.random.split(key, 6)
    in_dim = num_inputs + reward_size
    H2, H = 2 * hidden_size, hidden_size

    w1 = 0.02 * jax.random.normal(ks[0], (H2, in_dim), jnp.float32)
    b1 = jax.random.uniform(ks[1], (H2,), jnp.float32,
                            -1.0 / in_dim ** 0.5, 1.0 / in_dim ** 0.5)
    w2 = 0.02 * jax.random.normal(ks[2], (H, H2), jnp.float32)
    b2 = jax.random.uniform(ks[3], (H,), jnp.float32,
                            -1.0 / H2 ** 0.5, 1.0 / H2 ** 0.5)
    w3 = jax.random.uniform(ks[4], (num_outputs, H), jnp.float32, -0.003, 0.003)
    b3 = jax.random.uniform(ks[5], (num_outputs,), jnp.float32,
                            -1.0 / H ** 0.5, 1.0 / H ** 0.5)
    return (w1, b1, w2, b2, w3, b3)


def actor_reference(inputs, preference, params):
    """Pure-JAX f32 reference of the PyTorch forward."""
    w1, b1, w2, b2, w3, b3 = params
    x = jnp.concatenate([inputs, preference], axis=1)
    h1 = jax.nn.relu(x @ w1.T + b1)
    h2 = jax.nn.relu(h1 @ w2.T + b2)
    return jnp.tanh(h2 @ w3.T + b3)


if __name__ == "__main__":
    hidden_size = 32
    num_inputs = 12
    reward_size = 4
    num_outputs = 3  # action_space.shape[0]

    key = jax.random.PRNGKey(0)
    k_in, k_pref, k_par = jax.random.split(key, 3)
    params = init_actor_params(k_par, hidden_size, num_inputs, num_outputs, reward_size)
    packed = prepare_params(params)   # one-time repack, hoisted out of forward

    # Case 1: tiny batch -> single grid step.
    batch = 8
    inputs = jax.random.normal(k_in, (batch, num_inputs), jnp.float32)
    preference = jax.random.normal(k_pref, (batch, reward_size), jnp.float32)
    mu = jax.block_until_ready(
        actor_forward(inputs, preference, packed, num_actions=num_outputs))
    ref = actor_reference(inputs, preference, params)
    assert mu.shape == (batch, num_outputs)
    assert jnp.allclose(mu, ref, atol=1e-2, rtol=1e-2), "mismatch vs reference (B=8)"

    # Case 2: ragged batch, still a single grid step after lane padding.
    batch2 = 37
    k_in2, k_pref2 = jax.random.split(jax.random.PRNGKey(1))
    inputs2 = jax.random.normal(k_in2, (batch2, num_inputs), jnp.float32)
    preference2 = jax.random.normal(k_pref2, (batch2, reward_size), jnp.float32)
    mu2 = jax.block_until_ready(
        actor_forward(inputs2, preference2, packed, num_actions=num_outputs))
    ref2 = actor_reference(inputs2, preference2, params)
    assert mu2.shape == (batch2, num_outputs)
    assert jnp.allclose(mu2, ref2, atol=1e-2, rtol=1e-2), "mismatch vs reference (B=37)"

    # Case 3: larger batch + small tile -> multi-step grid (megacore-parallel
    # path) with batch padding.
    batch3 = 300
    k_in3, k_pref3 = jax.random.split(jax.random.PRNGKey(2))
    inputs3 = jax.random.normal(k_in3, (batch3, num_inputs), jnp.float32)
    preference3 = jax.random.normal(k_pref3, (batch3, reward_size), jnp.float32)
    mu3 = jax.block_until_ready(
        actor_forward(inputs3, preference3, packed, num_actions=num_outputs,
                      block_batch=128))
    ref3 = actor_reference(inputs3, preference3, params)
    assert mu3.shape == (batch3, num_outputs)
    assert jnp.allclose(mu3, ref3, atol=1e-2, rtol=1e-2), "mismatch vs reference (B=300)"

    print("KERNEL_OK")
</pallas_src>

<mosaic_0001>
module attributes {stable_mosaic.version = 11 : i64} {
  func.func @actor_kernel(%arg0: i32, %arg1: memref<16x128xbf16, #tpu.memory_space<vmem>>, %arg2: memref<64x16xbf16, #tpu.memory_space<vmem>>, %arg3: memref<64x1xf32, #tpu.memory_space<vmem>>, %arg4: memref<32x64xbf16, #tpu.memory_space<vmem>>, %arg5: memref<32x1xf32, #tpu.memory_space<vmem>>, %arg6: memref<8x32xbf16, #tpu.memory_space<vmem>>, %arg7: memref<8x1xf32, #tpu.memory_space<vmem>>, %arg8: memref<8x128xf32, #tpu.memory_space<vmem>>) attributes {dimension_semantics = [#tpu.dimension_semantics<parallel>], iteration_bounds = array<i64: 1>, scalar_prefetch = 0 : i64, scratch_operands = 0 : i64, tpu.core_type = #tpu.core_type<tc>, window_params = [{transform_indices = @transform_0, window_bounds = array<i64: 16, 128>}, {pipeline_mode = #tpu.pipeline_mode<synchronous>, transform_indices = @transform_1, window_bounds = array<i64: 64, 16>}, {pipeline_mode = #tpu.pipeline_mode<synchronous>, transform_indices = @transform_2, window_bounds = array<i64: 64, 1>}, {pipeline_mode = #tpu.pipeline_mode<synchronous>, transform_indices = @transform_3, window_bounds = array<i64: 32, 64>}, {pipeline_mode = #tpu.pipeline_mode<synchronous>, transform_indices = @transform_4, window_bounds = array<i64: 32, 1>}, {pipeline_mode = #tpu.pipeline_mode<synchronous>, transform_indices = @transform_5, window_bounds = array<i64: 8, 32>}, {pipeline_mode = #tpu.pipeline_mode<synchronous>, transform_indices = @transform_6, window_bounds = array<i64: 8, 1>}, {transform_indices = @transform_7, window_bounds = array<i64: 8, 128>}]} {
    %c0 = arith.constant 0 : index
    %c0_0 = arith.constant 0 : index
    %0 = vector.load %arg1[%c0, %c0_0] : memref<16x128xbf16, #tpu.memory_space<vmem>>, vector<16x128xbf16>
    %c0_1 = arith.constant 0 : index
    %c0_2 = arith.constant 0 : index
    %1 = vector.load %arg2[%c0_1, %c0_2] : memref<64x16xbf16, #tpu.memory_space<vmem>>, vector<64x16xbf16>
    %cst = arith.constant dense<0.000000e+00> : vector<64x128xf32>
    %2 = tpu.matmul %1, %0, %cst {dimension_numbers = #tpu.dot_dimension_numbers<[1], [0], [0], [1], [0, 0, 1, 1], [], []>} : vector<64x16xbf16>, vector<16x128xbf16>, vector<64x128xf32> -> vector<64x128xf32>
    %c0_3 = arith.constant 0 : index
    %c0_4 = arith.constant 0 : index
    %3 = vector.load %arg3[%c0_3, %c0_4] : memref<64x1xf32, #tpu.memory_space<vmem>>, vector<64x1xf32>
    %4 = vector.broadcast %3 : vector<64x1xf32> to vector<64x128xf32>
    %5 = arith.addf %2, %4 : vector<64x128xf32>
    %cst_5 = arith.constant 0.000000e+00 : f32
    %6 = vector.broadcast %cst_5 : f32 to vector<64x128xf32>
    %7 = arith.maximumf %5, %6 : vector<64x128xf32>
    %c0_6 = arith.constant 0 : index
    %c0_7 = arith.constant 0 : index
    %8 = vector.load %arg4[%c0_6, %c0_7] : memref<32x64xbf16, #tpu.memory_space<vmem>>, vector<32x64xbf16>
    %9 = arith.truncf %7 : vector<64x128xf32> to vector<64x128xbf16>
    %cst_8 = arith.constant dense<0.000000e+00> : vector<32x128xf32>
    %10 = tpu.matmul %8, %9, %cst_8 {dimension_numbers = #tpu.dot_dimension_numbers<[1], [0], [0], [1], [0, 0, 1, 1], [], []>} : vector<32x64xbf16>, vector<64x128xbf16>, vector<32x128xf32> -> vector<32x128xf32>
    %c0_9 = arith.constant 0 : index
    %c0_10 = arith.constant 0 : index
    %11 = vector.load %arg5[%c0_9, %c0_10] : memref<32x1xf32, #tpu.memory_space<vmem>>, vector<32x1xf32>
    %12 = vector.broadcast %11 : vector<32x1xf32> to vector<32x128xf32>
    %13 = arith.addf %10, %12 : vector<32x128xf32>
    %cst_11 = arith.constant 0.000000e+00 : f32
    %14 = vector.broadcast %cst_11 : f32 to vector<32x128xf32>
    %15 = arith.maximumf %13, %14 : vector<32x128xf32>
    %c0_12 = arith.constant 0 : index
    %c0_13 = arith.constant 0 : index
    %16 = vector.load %arg6[%c0_12, %c0_13] : memref<8x32xbf16, #tpu.memory_space<vmem>>, vector<8x32xbf16>
    %17 = arith.truncf %15 : vector<32x128xf32> to vector<32x128xbf16>
    %cst_14 = arith.constant dense<0.000000e+00> : vector<8x128xf32>
    %18 = tpu.matmul %16, %17, %cst_14 {dimension_numbers = #tpu.dot_dimension_numbers<[1], [0], [0], [1], [0, 0, 1, 1], [], []>} : vector<8x32xbf16>, vector<32x128xbf16>, vector<8x128xf32> -> vector<8x128xf32>
    %c0_15 = arith.constant 0 : index
    %c0_16 = arith.constant 0 : index
    %19 = vector.load %arg7[%c0_15, %c0_16] : memref<8x1xf32, #tpu.memory_space<vmem>>, vector<8x1xf32>
    %20 = vector.broadcast %19 : vector<8x1xf32> to vector<8x128xf32>
    %21 = arith.addf %18, %20 : vector<8x128xf32>
    %22 = math.tanh %21 : vector<8x128xf32>
    %c0_17 = arith.constant 0 : index
    %c0_18 = arith.constant 0 : index
    %23 = vector.load %arg8[%c0_17, %c0_18] : memref<8x128xf32, #tpu.memory_space<vmem>>, vector<8x128xf32>
    tpu.vector_store %arg8[%c0_17, %c0_18], %22 {strides = array<i32>} : memref<8x128xf32, #tpu.memory_space<vmem>>, vector<8x128xf32>,
    return
  }
  func.func @transform_0(%arg0: i32) -> (i32, i32) {
    %c0_i32 = arith.constant 0 : i32
    %c0_i32_0 = arith.constant 0 : i32
    return %c0_i32, %arg0 : i32, i32
  }
  func.func @transform_1(%arg0: i32) -> (i32, i32) {
    %c0_i32 = arith.constant 0 : i32
    %c0_i32_0 = arith.constant 0 : i32
    %c0_i32_1 = arith.constant 0 : i32
    return %c0_i32, %c0_i32_0 : i32, i32
  }
  func.func @transform_2(%arg0: i32) -> (i32, i32) {
    %c0_i32 = arith.constant 0 : i32
    %c0_i32_0 = arith.constant 0 : i32
    %c0_i32_1 = arith.constant 0 : i32
    return %c0_i32, %c0_i32_0 : i32, i32
  }
  func.func @transform_3(%arg0: i32) -> (i32, i32) {
    %c0_i32 = arith.constant 0 : i32
    %c0_i32_0 = arith.constant 0 : i32
    %c0_i32_1 = arith.constant 0 : i32
    return %c0_i32, %c0_i32_0 : i32, i32
  }
  func.func @transform_4(%arg0: i32) -> (i32, i32) {
    %c0_i32 = arith.constant 0 : i32
    %c0_i32_0 = arith.constant 0 : i32
    %c0_i32_1 = arith.constant 0 : i32
    return %c0_i32, %c0_i32_0 : i32, i32
  }
  func.func @transform_5(%arg0: i32) -> (i32, i32) {
    %c0_i32 = arith.constant 0 : i32
    %c0_i32_0 = arith.constant 0 : i32
    %c0_i32_1 = arith.constant 0 : i32
    return %c0_i32, %c0_i32_0 : i32, i32
  }
  func.func @transform_6(%arg0: i32) -> (i32, i32) {
    %c0_i32 = arith.constant 0 : i32
    %c0_i32_0 = arith.constant 0 : i32
    %c0_i32_1 = arith.constant 0 : i32
    return %c0_i32, %c0_i32_0 : i32, i32
  }
  func.func @transform_7(%arg0: i32) -> (i32, i32) {
    %c0_i32 = arith.constant 0 : i32
    %c0_i32_0 = arith.constant 0 : i32
    return %c0_i32, %arg0 : i32, i32
  }
}

</mosaic_0001>

<llo_original>
// kernel: actor_forward.1
$region0: #{actor_forward.1}
  #allocation0 [shape = 'u32[]', space=smem, size = 0x4, offset = 0x4, fixed_abs, tag = 'smem constant byte address 0x4 - core index']
  #allocation1 [shape = 'u32[144,128]{1,0:T(1,128)}', space=vmem, size = 0x12000, scoped, tag = 'internal scratch']
  %s0 = inlined_call_operand.vmem [shape: bf16[16,128], index: 0, kind: input, shape index: {}]
  %s1 = inlined_call_operand.vmem [shape: bf16[64,16], index: 1, kind: input, shape index: {}]
  %s2 = inlined_call_operand.vmem [shape: f32[64,1], index: 2, kind: input, shape index: {}]
  %s3 = inlined_call_operand.vmem [shape: bf16[32,64], index: 3, kind: input, shape index: {}]
  %s4 = inlined_call_operand.vmem [shape: f32[32,1], index: 4, kind: input, shape index: {}]
  %s5 = inlined_call_operand.vmem [shape: bf16[8,32], index: 5, kind: input, shape index: {}]
  %s6 = inlined_call_operand.vmem [shape: f32[8,1], index: 6, kind: input, shape index: {}]
  %s7 = inlined_call_operand.vmem [shape: f32[8,128], index: 7, kind: output, shape index: {}]
  %s8 = sld [smem:[#allocation0]]
  $region38: #{actor_forward.1} parent=0
    _
  %s10 = ssub.s32 1, %s8
  %s11 = scalar_select 0, %s10, %s8
  // Predicated region
  $region2: #{actor_forward.1} parent=0 // pred_check
    _
  $region3: #{actor_forward.1} parent=0 // pred_check_branch
    %13 = sbr.rel (0) target = $region5
  $region4: #{actor_forward.1} parent=0 // pred_region
    _
  $region5: #{actor_forward.1} parent=0 // pred_fallthru
    _
  // Predicated region
  $region6: #{actor_forward.1} parent=0 // pred_check
    _
  $region7: #{actor_forward.1} parent=0 // pred_check_branch
    %15 = sbr.rel (0) target = $region9
  $region8: #{actor_forward.1} parent=0 // pred_region
    _
  $region9: #{actor_forward.1} parent=0 // pred_fallthru
    _
  // Predicated region
  $region10: #{actor_forward.1} parent=0 // pred_check
    _
  $region11: #{actor_forward.1} parent=0 // pred_check_branch
    %17 = sbr.rel (0) target = $region13
  $region12: #{actor_forward.1} parent=0 // pred_region
    _
  $region13: #{actor_forward.1} parent=0 // pred_fallthru
    _
  // Predicated region
  $region14: #{actor_forward.1} parent=0 // pred_check
    _
  $region15: #{actor_forward.1} parent=0 // pred_check_branch
    %19 = sbr.rel (0) target = $region17
  $region16: #{actor_forward.1} parent=0 // pred_region
    _
  $region17: #{actor_forward.1} parent=0 // pred_fallthru
    _
  // Predicated region
  $region18: #{actor_forward.1} parent=0 // pred_check
    _
  $region19: #{actor_forward.1} parent=0 // pred_check_branch
    %21 = sbr.rel (0) target = $region21
  $region20: #{actor_forward.1} parent=0 // pred_region
    _
  $region21: #{actor_forward.1} parent=0 // pred_fallthru
    _
  // Predicated region
  $region22: #{actor_forward.1} parent=0 // pred_check
    _
  $region23: #{actor_forward.1} parent=0 // pred_check_branch
    %23 = sbr.rel (0) target = $region25
  $region24: #{actor_forward.1} parent=0 // pred_region
    _
  $region25: #{actor_forward.1} parent=0 // pred_fallthru
    _
  // Predicated region
  $region26: #{actor_forward.1} parent=0 // pred_check
    _
  $region27: #{actor_forward.1} parent=0 // pred_check_branch
    %25 = sbr.rel (0) target = $region29
  $region28: #{actor_forward.1} parent=0 // pred_region
    _
  $region29: #{actor_forward.1} parent=0 // pred_fallthru
    _
  %v27 = vld [vmem:[%s0] sm:$0xf]
  %v28 = vld [vmem:[%s0 + $0x4] sm:$0xf]
  %v29 = vld [vmem:[%s1] sm:$0xf]
  %v30 = vld [vmem:[%s1 + $0x4] sm:$0xf]
  %v31 = vld [vmem:[%s1 + $0x8] sm:$0xf]
  %v32 = vld [vmem:[%s1 + $0xc] sm:$0xf]
  %v33 = vld [vmem:[%s1 + $0x10] sm:$0xf]
  %v34 = vld [vmem:[%s1 + $0x14] sm:$0xf]
  %v35 = vld [vmem:[%s1 + $0x18] sm:$0xf]
  %v36 = vld [vmem:[%s1 + $0x1c] sm:$0xf]
  %v37 = vld [vmem:[%s2] sm:$0xff]
  %v38 = vld [vmem:[%s2 + $0x8] sm:$0xff]
  %v39 = vld [vmem:[%s2 + $0x10] sm:$0xff]
  %v40 = vld [vmem:[%s2 + $0x18] sm:$0xff]
  %v41 = vld [vmem:[%s2 + $0x20] sm:$0xff]
  %v42 = vld [vmem:[%s2 + $0x28] sm:$0xff]
  %v43 = vld [vmem:[%s2 + $0x30] sm:$0xff]
  %v44 = vld [vmem:[%s2 + $0x38] sm:$0xff]
  %46 = vset.pattern.permute.xlu0 0
  %47 = vperm.xlu0 %46, %v37
  %v48 = vpop.permute.xlu0 %47
  %51 = vset.pattern.permute.xlu0 0
  %52 = vperm.xlu0 %51, %v38
  %v53 = vpop.permute.xlu0 %52
  %56 = vset.pattern.permute.xlu0 0
  %57 = vperm.xlu0 %56, %v39
  %v58 = vpop.permute.xlu0 %57
  %61 = vset.pattern.permute.xlu0 0
  %62 = vperm.xlu0 %61, %v40
  %v63 = vpop.permute.xlu0 %62
  %66 = vset.pattern.permute.xlu0 0
  %67 = vperm.xlu0 %66, %v41
  %v68 = vpop.permute.xlu0 %67
  %71 = vset.pattern.permute.xlu0 0
  %72 = vperm.xlu0 %71, %v42
  %v73 = vpop.permute.xlu0 %72
  %76 = vset.pattern.permute.xlu0 0
  %77 = vperm.xlu0 %76, %v43
  %v78 = vpop.permute.xlu0 %77
  %81 = vset.pattern.permute.xlu0 0
  %82 = vperm.xlu0 %81, %v44
  %v83 = vpop.permute.xlu0 %82
  %v93 = vunpack.c.l.b16 %v29
  %v94 = vunpack.c.l.b16 %v30
  %v95 = vunpack.c.l.b16 %v31
  %v96 = vunpack.c.l.b16 %v32
  %v97 = vunpack.c.l.b16 %v33
  %v98 = vunpack.c.l.b16 %v34
  %v99 = vunpack.c.l.b16 %v35
  %v100 = vunpack.c.l.b16 %v36
  %v101 = vpack.c.b16 %v94, %v93
  %v102 = vpack.c.b16 %v96, %v95
  %v103 = vpack.c.b16 %v98, %v97
  %v104 = vpack.c.b16 %v100, %v99
  %v107 = vunpack.c.l.b16 %v27
  %v108 = vunpack.c.l.b16 %v28
  %v109 = vpack.c.b16 %v108, %v107
  %vm111 = vcmask 130048
  %v113 = vsel %vm111, %v101, 0
  %v116 = vsel %vm111, %v102, 0
  %v119 = vsel %vm111, %v103, 0
  %v122 = vsel %vm111, %v104, 0
  %124 = vmatprep.subr.bf16.mxu0 0
  %125 = vmatpush1.bf16.msra.mxu0 %v109
  %126 = vmatprep.subr.bf16.mxu0 0
  %127 = vmatpush1.bf16.msra.mxu0 0
  %128 = vmatprep.subr.bf16.mxu0 0
  %129 = vmatpush1.bf16.msra.mxu0 0
  %130 = vmatprep.subr.bf16.mxu0 0
  %131 = vmatpush1.bf16.msra.mxu0 0
  %132 = vmatprep.subr.bf16.mxu0 0
  %133 = vmatpush1.bf16.msra.mxu0 0
  %134 = vmatprep.subr.bf16.mxu0 0
  %135 = vmatpush1.bf16.msra.mxu0 0
  %136 = vmatprep.subr.bf16.mxu0 0
  %137 = vmatpush1.bf16.msra.mxu0 0
  %138 = vmatprep.subr.bf16.mxu0 0
  %139 = vmatpush1.bf16.msra.mxu0 0
  %140 = vmatprep.subr.bf16.mxu0 0
  %141 = vmatpush1.bf16.msra.mxu0 0
  %142 = vmatprep.subr.bf16.mxu0 0
  %143 = vmatpush1.bf16.msra.mxu0 0
  %144 = vmatprep.subr.bf16.mxu0 0
  %145 = vmatpush1.bf16.msra.mxu0 0
  %146 = vmatprep.subr.bf16.mxu0 0
  %147 = vmatpush1.bf16.msra.mxu0 0
  %148 = vmatprep.subr.bf16.mxu0 0
  %149 = vmatpush1.bf16.msra.mxu0 0
  %150 = vmatprep.subr.bf16.mxu0 0
  %151 = vmatpush1.bf16.msra.mxu0 0
  %152 = vmatprep.subr.bf16.mxu0 0
  %153 = vmatpush1.bf16.msra.mxu0 0
  %154 = vmatprep.subr.bf16.mxu0 0
  %155 = vmatpush1.bf16.msra.mxu0 0
  %156 = vmatprep.mubr.bf16.mxu0 0
  %157 = vmatmul.mubr.bf16.gmra.mrb[0].mxu0 %v113
  %v158 = vpop.f32.mrb[0].mxu0
  %v159 = vadd.f32 %v48, %v158
  %v160 = vpop.f32.mrb[0].mxu0
  %v161 = vpop.f32.mrb[0].mxu0
  %v162 = vadd.f32 %v53, %v161
  %v163 = vpop.f32.mrb[0].mxu0
  %164 = vmatprep.mubr.bf16.mxu0 0
  %165 = vmatmul.mubr.bf16.gmra.mrb[0].mxu0 %v116
  %v166 = vpop.f32.mrb[0].mxu0
  %v167 = vadd.f32 %v58, %v166
  %v168 = vpop.f32.mrb[0].mxu0
  %v169 = vpop.f32.mrb[0].mxu0
  %v170 = vadd.f32 %v63, %v169
  %v171 = vpop.f32.mrb[0].mxu0
  %172 = vmatprep.mubr.bf16.mxu0 0
  %173 = vmatmul.mubr.bf16.gmra.mrb[0].mxu0 %v119
  %v174 = vpop.f32.mrb[0].mxu0
  %v175 = vadd.f32 %v68, %v174
  %v176 = vpop.f32.mrb[0].mxu0
  %v177 = vpop.f32.mrb[0].mxu0
  %v178 = vadd.f32 %v73, %v177
  %v179 = vpop.f32.mrb[0].mxu0
  %180 = vmatprep.mubr.bf16.mxu0 0
  %181 = vmatmul.mubr.bf16.gmra.mrb[0].mxu0 %v122
  %v182 = vpop.f32.mrb[0].mxu0
  %v183 = vadd.f32 %v78, %v182
  %v184 = vpop.f32.mrb[0].mxu0
  %v185 = vpop.f32.mrb[0].mxu0
  %v186 = vadd.f32 %v83, %v185
  %v187 = vpop.f32.mrb[0].mxu0
  %188 = vdwg.mxu0
  %v189 = vmax.f32 %v159, 0.0
  %v190 = vmax.f32 %v162, 0.0
  %v191 = vmax.f32 %v167, 0.0
  %v192 = vmax.f32 %v170, 0.0
  %v193 = vmax.f32 %v175, 0.0
  %v194 = vmax.f32 %v178, 0.0
  %v195 = vmax.f32 %v183, 0.0
  %v196 = vmax.f32 %v186, 0.0
  %v197 = vld [vmem:[%s3] sm:$0xf]
  %v198 = vld [vmem:[%s3 + $0x4] sm:$0xf]
  %v199 = vld [vmem:[%s3 + $0x8] sm:$0xf]
  %v200 = vld [vmem:[%s3 + $0xc] sm:$0xf]
  %v201 = vpack.c.bf16 %v190, %v189
  %v202 = vpack.c.bf16 %v192, %v191
  %v203 = vpack.c.bf16 %v194, %v193
  %v204 = vpack.c.bf16 %v196, %v195
  %v205 = vld [vmem:[%s4] sm:$0xff]
  %v206 = vld [vmem:[%s4 + $0x8] sm:$0xff]
  %v207 = vld [vmem:[%s4 + $0x10] sm:$0xff]
  %v208 = vld [vmem:[%s4 + $0x18] sm:$0xff]
  %210 = vset.pattern.permute.xlu0 0
  %211 = vperm.xlu0 %210, %v205
  %v212 = vpop.permute.xlu0 %211
  %215 = vset.pattern.permute.xlu0 0
  %216 = vperm.xlu0 %215, %v206
  %v217 = vpop.permute.xlu0 %216
  %220 = vset.pattern.permute.xlu0 0
  %221 = vperm.xlu0 %220, %v207
  %v222 = vpop.permute.xlu0 %221
  %225 = vset.pattern.permute.xlu0 0
  %226 = vperm.xlu0 %225, %v208
  %v227 = vpop.permute.xlu0 %226
  %v233 = vunpack.c.l.b16 %v197
  %v234 = vunpack.c.l.b16 %v198
  %v235 = vunpack.c.l.b16 %v199
  %v236 = vunpack.c.l.b16 %v200
  %v237 = vpack.c.b16 %v234, %v233
  %v238 = vpack.c.b16 %v236, %v235
  %vm239 = vcmask 523264
  %v241 = vsel %vm239, %v237, 0
  %v244 = vsel %vm239, %v238, 0
  %246 = vmatprep.subr.bf16.mxu0 0
  %247 = vmatpush1.bf16.msra.mxu0 %v201
  %248 = vmatprep.subr.bf16.mxu0 0
  %249 = vmatpush1.bf16.msra.mxu0 %v202
  %250 = vmatprep.subr.bf16.mxu0 0
  %251 = vmatpush1.bf16.msra.mxu0 %v203
  %252 = vmatprep.subr.bf16.mxu0 0
  %253 = vmatpush1.bf16.msra.mxu0 %v204
  %254 = vmatprep.subr.bf16.mxu0 0
  %255 = vmatpush1.bf16.msra.mxu0 0
  %256 = vmatprep.subr.bf16.mxu0 0
  %257 = vmatpush1.bf16.msra.mxu0 0
  %258 = vmatprep.subr.bf16.mxu0 0
  %259 = vmatpush1.bf16.msra.mxu0 0
  %260 = vmatprep.subr.bf16.mxu0 0
  %261 = vmatpush1.bf16.msra.mxu0 0
  %262 = vmatprep.subr.bf16.mxu0 0
  %263 = vmatpush1.bf16.msra.mxu0 0
  %264 = vmatprep.subr.bf16.mxu0 0
  %265 = vmatpush1.bf16.msra.mxu0 0
  %266 = vmatprep.subr.bf16.mxu0 0
  %267 = vmatpush1.bf16.msra.mxu0 0
  %268 = vmatprep.subr.bf16.mxu0 0
  %269 = vmatpush1.bf16.msra.mxu0 0
  %270 = vmatprep.subr.bf16.mxu0 0
  %271 = vmatpush1.bf16.msra.mxu0 0
  %272 = vmatprep.subr.bf16.mxu0 0
  %273 = vmatpush1.bf16.msra.mxu0 0
  %274 = vmatprep.subr.bf16.mxu0 0
  %275 = vmatpush1.bf16.msra.mxu0 0
  %276 = vmatprep.subr.bf16.mxu0 0
  %277 = vmatpush1.bf16.msra.mxu0 0
  %278 = vmatprep.mubr.bf16.mxu0 0
  %279 = vmatmul.mubr.bf16.gmra.mrb[0].mxu0 %v241
  %v280 = vpop.f32.mrb[0].mxu0
  %v281 = vadd.f32 %v212, %v280
  %v282 = vpop.f32.mrb[0].mxu0
  %v283 = vpop.f32.mrb[0].mxu0
  %v284 = vadd.f32 %v217, %v283
  %v285 = vpop.f32.mrb[0].mxu0
  %286 = vmatprep.mubr.bf16.mxu0 0
  %287 = vmatmul.mubr.bf16.gmra.mrb[0].mxu0 %v244
  %v288 = vpop.f32.mrb[0].mxu0
  %v289 = vadd.f32 %v222, %v288
  %v290 = vpop.f32.mrb[0].mxu0
  %v291 = vpop.f32.mrb[0].mxu0
  %v292 = vadd.f32 %v227, %v291
  %v293 = vpop.f32.mrb[0].mxu0
  %294 = vdwg.mxu0
  %v295 = vmax.f32 %v281, 0.0
  %v296 = vmax.f32 %v284, 0.0
  %v297 = vmax.f32 %v289, 0.0
  %v298 = vmax.f32 %v292, 0.0
  %v299 = vld [vmem:[%s5] sm:$0xf]
  %v300 = vpack.c.bf16 %v296, %v295
  %v301 = vpack.c.bf16 %v298, %v297
  %v302 = vld [vmem:[%s6] sm:$0xff]
  %304 = vset.pattern.permute.xlu0 0
  %305 = vperm.xlu0 %304, %v302
  %v306 = vpop.permute.xlu0 %305
  %vm308 = vcmask 261120
  %v310 = vsel %vm308, %v299, 0
  %312 = vmatprep.subr.bf16.mxu0 0
  %313 = vmatpush1.bf16.msra.mxu0 %v300
  %314 = vmatprep.subr.bf16.mxu0 0
  %315 = vmatpush1.bf16.msra.mxu0 %v301
  %316 = vmatprep.subr.bf16.mxu0 0
  %317 = vmatpush1.bf16.msra.mxu0 0
  %318 = vmatprep.subr.bf16.mxu0 0
  %319 = vmatpush1.bf16.msra.mxu0 0
  %320 = vmatprep.subr.bf16.mxu0 0
  %321 = vmatpush1.bf16.msra.mxu0 0
  %322 = vmatprep.subr.bf16.mxu0 0
  %323 = vmatpush1.bf16.msra.mxu0 0
  %324 = vmatprep.subr.bf16.mxu0 0
  %325 = vmatpush1.bf16.msra.mxu0 0
  %326 = vmatprep.subr.bf16.mxu0 0
  %327 = vmatpush1.bf16.msra.mxu0 0
  %328 = vmatprep.subr.bf16.mxu0 0
  %329 = vmatpush1.bf16.msra.mxu0 0
  %330 = vmatprep.subr.bf16.mxu0 0
  %331 = vmatpush1.bf16.msra.mxu0 0
  %332 = vmatprep.subr.bf16.mxu0 0
  %333 = vmatpush1.bf16.msra.mxu0 0
  %334 = vmatprep.subr.bf16.mxu0 0
  %335 = vmatpush1.bf16.msra.mxu0 0
  %336 = vmatprep.subr.bf16.mxu0 0
  %337 = vmatpush1.bf16.msra.mxu0 0
  %338 = vmatprep.subr.bf16.mxu0 0
  %339 = vmatpush1.bf16.msra.mxu0 0
  %340 = vmatprep.subr.bf16.mxu0 0
  %341 = vmatpush1.bf16.msra.mxu0 0
  %342 = vmatprep.subr.bf16.mxu0 0
  %343 = vmatpush1.bf16.msra.mxu0 0
  %344 = vmatprep.mubr.bf16.mxu0 0
  %345 = vmatmul.mubr.bf16.gmra.mrb[0].mxu0 %v310
  %v346 = vpop.f32.mrb[0].mxu0
  %v347 = vadd.f32 %v306, %v346
  %v348 = vpop.f32.mrb[0].mxu0
  %v349 = vpop.f32.mrb[0].mxu0
  %v350 = vpop.f32.mrb[0].mxu0
  %351 = vdwg.mxu0
  %v352 = vtanh.pop %v347
  %353 = vst [vmem:[%s7] sm:$0xff] %v352
  // Predicated region
  $region30: #{actor_forward.1} parent=0 // pred_check
    _
  $region31: #{actor_forward.1} parent=0 // pred_check_branch
    %355 = sbr.rel (0) target = $region33
  $region32: #{actor_forward.1} parent=0 // pred_region
    _
  $region33: #{actor_forward.1} parent=0 // pred_fallthru
    _
  // Predicated region
  $region34: #{actor_forward.1} parent=0 // pred_check
    _
  $region35: #{actor_forward.1} parent=0 // pred_check_branch
    %357 = sbr.rel (0) target = $region37
  $region36: #{actor_forward.1} parent=0 // pred_region
    _
  $region37: #{actor_forward.1} parent=0 // pred_fallthru
    _

</llo_original>
